<compile_context>
chip_gen: v7x
topology: tpu7x:2x2x1
jax: 0.10.0
libtpu: 0.0.40
codegen_flags: <defaults>
</compile_context>

<pallas_src>
import jax
import jax.numpy as jnp
from jax.experimental import pallas as pl
from jax.experimental.pallas import tpu as pltpu

# Preferred lane widths (all multiples of 128), widest first.
LANE_CANDIDATES = (1024, 896, 768, 640, 512, 384, 256, 128)
MAX_TILE_BYTES = 4 << 20          # 4 MiB per input tile (1024 x 1024 f32)
VMEM_LIMIT_BYTES = 48 << 20       # 24 MiB live double-buffered + headroom; < v7x 64 MiB


def mix_kernel(m_ref, f1_ref, f2_ref, o_ref):
    # m_ref: (1, 1) f32 in SMEM holding the precomputed mix factor sigmoid(w).
    m = m_ref[0, 0]                               # scalar, broadcast by VPU
    f1 = f1_ref[...]
    f2 = f2_ref[...]
    # lerp: f1*m + f2*(1-m) == f2 + m*(f1 - f2)  (3 VPU ops)
    o_ref[...] = (f2 + m * (f1 - f2)).astype(o_ref.dtype)


def _pick_lane(total):
    for lane in LANE_CANDIDATES:
        if total % lane == 0:
            return lane
    return None


@jax.jit
def mix_pallas(fea1, fea2, w):
    """fea1, fea2: (N, C, H, W); w: scalar parameter (shape (1,))."""
    orig_shape = fea1.shape
    dtype = fea1.dtype
    total = fea1.size
    itemsize = jnp.dtype(dtype).itemsize

    # Scalar sigmoid once (identical semantics to the module's nn.Sigmoid on w).
    m = jax.nn.sigmoid(jnp.asarray(w, jnp.float32).reshape(()))
    m2 = m.reshape(1, 1).astype(jnp.float32)

    # Lane-dense flatten without copies: pick a 128-multiple lane width that
    # divides the element count exactly (contiguous reshape == free under jit).
    f1 = fea1.reshape(-1)
    f2 = fea2.reshape(-1)
    lane = _pick_lane(total)
    pad = 0
    if lane is None:
        # TODO(synk): ragged sizes (total % 128 != 0) still take the padded
        # path; rare for NCHW feature maps.
        lane = LANE_CANDIDATES[0]
        pad = (-total) % lane
        f1 = jnp.pad(f1, (0, pad))
        f2 = jnp.pad(f2, (0, pad))
    rows = (total + pad) // lane
    f1 = f1.reshape(rows, lane)
    f2 = f2.reshape(rows, lane)

    # Row tiling: cap tile at ~4 MiB; keep block rows a multiple of 8; for
    # small inputs still emit >=2 grid steps (rows >= 16) so v7x megacore can
    # shard across both TensorCores. Ragged last blocks are masked by Pallas.
    max_block_rows = max(8, (MAX_TILE_BYTES // (lane * itemsize)) // 8 * 8)
    if rows > max_block_rows:
        block_rows = max_block_rows
    elif rows >= 16:
        block_rows = 8 * pl.cdiv(pl.cdiv(rows, 2), 8)
    else:
        block_rows = rows  # block == full extent -> allowed without 8-divisibility
    grid = (pl.cdiv(rows, block_rows),)

    tile_spec = pl.BlockSpec((block_rows, lane), lambda i: (i, 0))

    out2d = pl.pallas_call(
        mix_kernel,
        out_shape=jax.ShapeDtypeStruct((rows, lane), dtype),
        grid=grid,
        in_specs=[
            pl.BlockSpec(memory_space=pltpu.MemorySpace.SMEM),  # mix factor (1,1)
            tile_spec,                                           # fea1 tiles
            tile_spec,                                           # fea2 tiles
        ],
        out_specs=tile_spec,
        compiler_params=pltpu.CompilerParams(
            dimension_semantics=("parallel",),
            vmem_limit_bytes=VMEM_LIMIT_BYTES,
        ),
        cost_estimate=pl.CostEstimate(
            flops=3 * total,
            transcendentals=0,
            bytes_accessed=3 * total * itemsize,
        ),
    )(m2, f1, f2)

    out = out2d.reshape(-1)
    if pad:
        out = out[:total]
    return out.reshape(orig_shape)


if __name__ == "__main__":
    # Deterministic parameter init, matching nn.Parameter(torch.FloatTensor([-0.8]))
    m_init = -0.8
    w = jnp.array([m_init], dtype=jnp.float32)

    # Small deterministic inputs consistent with the module's forward, NCHW.
    key = jax.random.PRNGKey(0)
    k1, k2 = jax.random.split(key)
    fea1 = jax.random.normal(k1, (2, 4, 16, 16), dtype=jnp.float32)
    fea2 = jax.random.normal(k2, (2, 4, 16, 16), dtype=jnp.float32)

    out = jax.block_until_ready(mix_pallas(fea1, fea2, w))

    # Pure-JAX reference for correctness.
    mix_factor = jax.nn.sigmoid(w)[0]
    ref = fea1 * mix_factor + fea2 * (1.0 - mix_factor)

    assert out.shape == fea1.shape and out.dtype == fea1.dtype
    assert jnp.allclose(out, ref, atol=1e-6, rtol=1e-6), "mismatch vs reference"
    print("KERNEL_OK")
</pallas_src>

<mosaic_0001>
module attributes {stable_mosaic.version = 11 : i64} {
  func.func @mix_kernel(%arg0: i32, %arg1: memref<1x1xf32, #tpu.memory_space<smem>>, %arg2: memref<2x1024xf32, #tpu.memory_space<vmem>>, %arg3: memref<2x1024xf32, #tpu.memory_space<vmem>>, %arg4: memref<2x1024xf32, #tpu.memory_space<vmem>>) attributes {dimension_semantics = [#tpu.dimension_semantics<parallel>], iteration_bounds = array<i64: 1>, scalar_prefetch = 0 : i64, scratch_operands = 0 : i64, tpu.core_type = #tpu.core_type<tc>, window_params = [{transform_indices = @transform_0, window_bounds = array<i64: 1, 1>}, {transform_indices = @transform_1, window_bounds = array<i64: 2, 1024>}, {transform_indices = @transform_2, window_bounds = array<i64: 2, 1024>}, {transform_indices = @transform_3, window_bounds = array<i64: 2, 1024>}]} {
    %c0 = arith.constant 0 : index
    %c0_0 = arith.constant 0 : index
    %0 = memref.load %arg1[%c0, %c0_0] : memref<1x1xf32, #tpu.memory_space<smem>>
    %c0_1 = arith.constant 0 : index
    %c0_2 = arith.constant 0 : index
    %1 = vector.load %arg2[%c0_1, %c0_2] : memref<2x1024xf32, #tpu.memory_space<vmem>>, vector<2x1024xf32>
    %c0_3 = arith.constant 0 : index
    %c0_4 = arith.constant 0 : index
    %2 = vector.load %arg3[%c0_3, %c0_4] : memref<2x1024xf32, #tpu.memory_space<vmem>>, vector<2x1024xf32>
    %3 = arith.subf %1, %2 : vector<2x1024xf32>
    %4 = vector.broadcast %0 : f32 to vector<2x1024xf32>
    %5 = arith.mulf %4, %3 : vector<2x1024xf32>
    %6 = arith.addf %2, %5 : vector<2x1024xf32>
    %c0_5 = arith.constant 0 : index
    %c0_6 = arith.constant 0 : index
    %7 = vector.load %arg4[%c0_5, %c0_6] : memref<2x1024xf32, #tpu.memory_space<vmem>>, vector<2x1024xf32>
    tpu.vector_store %arg4[%c0_5, %c0_6], %6 {strides = array<i32>} : memref<2x1024xf32, #tpu.memory_space<vmem>>, vector<2x1024xf32>,
    return
  }
  func.func @transform_0(%arg0: i32) -> (i32, i32) {
    %c0_i32 = arith.constant 0 : i32
    %c0_i32_0 = arith.constant 0 : i32
    %c0_i32_1 = arith.constant 0 : i32
    return %c0_i32, %c0_i32_0 : i32, i32
  }
  func.func @transform_1(%arg0: i32) -> (i32, i32) {
    %c0_i32 = arith.constant 0 : i32
    %c0_i32_0 = arith.constant 0 : i32
    return %arg0, %c0_i32 : i32, i32
  }
  func.func @transform_2(%arg0: i32) -> (i32, i32) {
    %c0_i32 = arith.constant 0 : i32
    %c0_i32_0 = arith.constant 0 : i32
    return %arg0, %c0_i32 : i32, i32
  }
  func.func @transform_3(%arg0: i32) -> (i32, i32) {
    %c0_i32 = arith.constant 0 : i32
    %c0_i32_0 = arith.constant 0 : i32
    return %arg0, %c0_i32 : i32, i32
  }
}

</mosaic_0001>

<llo_original>
// kernel: mix_pallas.1
$region0: #{mix_pallas.1}
  #allocation0 [shape = 'u32[]', space=smem, size = 0x4, offset = 0x4, fixed_abs, tag = 'smem constant byte address 0x4 - core index']
  #allocation1 [shape = 'u32[144,128]{1,0:T(1,128)}', space=vmem, size = 0x12000, scoped, tag = 'internal scratch']
  #allocation2 [shape = 'f32[1,1]{1,0:T(1,128)S(6)}', space=smem, size = 0x200, scoped, tag = 'scoped memory for mix_pallas.1']
  %s0 = inlined_call_operand.<no memory space> [shape: f32[1,1], index: 0, kind: input, shape index: {}]
  %s1 = inlined_call_operand.vmem [shape: f32[2,1024], index: 1, kind: input, shape index: {}]
  %s2 = inlined_call_operand.vmem [shape: f32[2,1024], index: 2, kind: input, shape index: {}]
  %s3 = inlined_call_operand.vmem [shape: f32[2,1024], index: 3, kind: output, shape index: {}]
  %s4 = sld [smem:[#allocation0]]
  $region22: #{mix_pallas.1} parent=0
    _
  %s6 = ssub.s32 1, %s4
  %s7 = scalar_select 0, %s6, %s4
  %8 = sst [smem:[#allocation2]] %s0
  // Predicated region
  $region2: #{mix_pallas.1} parent=0 // pred_check
    _
  $region3: #{mix_pallas.1} parent=0 // pred_check_branch
    %10 = sbr.rel (0) target = $region5
  $region4: #{mix_pallas.1} parent=0 // pred_region
    _
  $region5: #{mix_pallas.1} parent=0 // pred_fallthru
    _
  // Predicated region
  $region6: #{mix_pallas.1} parent=0 // pred_check
    _
  $region7: #{mix_pallas.1} parent=0 // pred_check_branch
    %12 = sbr.rel (0) target = $region9
  $region8: #{mix_pallas.1} parent=0 // pred_region
    _
  $region9: #{mix_pallas.1} parent=0 // pred_fallthru
    _
  // Predicated region
  $region10: #{mix_pallas.1} parent=0 // pred_check
    _
  $region11: #{mix_pallas.1} parent=0 // pred_check_branch
    %14 = sbr.rel (0) target = $region13
  $region12: #{mix_pallas.1} parent=0 // pred_region
    _
  $region13: #{mix_pallas.1} parent=0 // pred_fallthru
    _
  %s15 = sld [smem:[#allocation2]]
  %v16 = vld [vmem:[%s1] sm:$0xff]
  %v17 = vld [vmem:[%s1 + $0x8] sm:$0xff]
  %v18 = vld [vmem:[%s2] sm:$0xff]
  %v19 = vld [vmem:[%s2 + $0x8] sm:$0xff]
  %v20 = vsub.f32 %v16, %v18
  %v21 = vsub.f32 %v17, %v19
  %v22 = vstv %s15
  %v23 = vmul.f32 %v22, %v20
  %v24 = vmul.f32 %v22, %v21
  %v25 = vadd.f32 %v18, %v23
  %v26 = vadd.f32 %v19, %v24
  %27 = vst [vmem:[%s3] sm:$0xff] %v25
  %28 = vst [vmem:[%s3 + $0x8] sm:$0xff] %v26
  // Predicated region
  $region14: #{mix_pallas.1} parent=0 // pred_check
    _
  $region15: #{mix_pallas.1} parent=0 // pred_check_branch
    %30 = sbr.rel (0) target = $region17
  $region16: #{mix_pallas.1} parent=0 // pred_region
    _
  $region17: #{mix_pallas.1} parent=0 // pred_fallthru
    _
  // Predicated region
  $region18: #{mix_pallas.1} parent=0 // pred_check
    _
  $region19: #{mix_pallas.1} parent=0 // pred_check_branch
    %32 = sbr.rel (0) target = $region21
  $region20: #{mix_pallas.1} parent=0 // pred_region
    _
  $region21: #{mix_pallas.1} parent=0 // pred_fallthru
    _

</llo_original>
